<compile_context>
chip_gen: v7x
topology: tpu7x:2x2x1
jax: 0.10.0
libtpu: 0.0.40
codegen_flags: <defaults>
</compile_context>

<pallas_src>
import jax
import jax.numpy as jnp
from jax.experimental import pallas as pl
from jax.experimental.pallas import tpu as pltpu


def rnn_kernel(x_ref, wi_ref, wh_ref, out_ref, h_scratch):
    # Grid axes: (batch_tile b, time_chunk c).  Time is the inner, sequential axis.
    c = pl.program_id(1)

    # init_hidden(): zero the hidden state at the start of each batch tile's
    # time loop.
    @pl.when(c == 0)
    def _():
        h_scratch[...] = jnp.zeros_like(h_scratch)

    t_chunk, b_tile, input_size = x_ref.shape
    hidden_size = wh_ref.shape[0]

    # Hoisted input projection: one MXU matmul for the whole time chunk.
    x_flat = x_ref[...].reshape(t_chunk * b_tile, input_size)          # bf16
    xw = jnp.dot(x_flat, wi_ref[...], preferred_element_type=jnp.float32)
    xw = xw.reshape(t_chunk, b_tile, hidden_size)                      # f32

    wh = wh_ref[...]                                                   # bf16
    h = h_scratch[...]                                                 # f32

    # Static unroll over the time chunk; only h @ Wh + tanh is on the serial
    # dependence chain.  Rows land in the chunk-wide VMEM output block which
    # is flushed to HBM once per grid step by the pipeline.
    for t in range(t_chunk):
        pre = xw[t] + jnp.dot(h.astype(wh.dtype), wh,
                              preferred_element_type=jnp.float32)
        h = jnp.tanh(pre)
        out_ref[t] = h.astype(out_ref.dtype)

    h_scratch[...] = h


def rnn_forward(x, w_i2h, w_h2h, *, t_chunk=4, b_tile=None):
    """x: (seq_len, batch, input_size)
       w_i2h: (hidden_size, input_size)   (PyTorch nn.Linear layout)
       w_h2h: (hidden_size, hidden_size)  (PyTorch nn.Linear layout)
    Returns (output, hidden) matching the PyTorch module."""
    seq_len, batch, input_size = x.shape
    hidden_size = w_i2h.shape[0]

    if b_tile is None:
        b_tile = batch if batch <= 8 else 8
    assert seq_len % t_chunk == 0, "seq_len must be divisible by t_chunk"
    assert batch % b_tile == 0, "batch must be divisible by b_tile"
    assert b_tile == batch or b_tile % 8 == 0, "b_tile must be 8-aligned or full batch"

    # nn.Linear computes x @ W^T; pre-transpose so the kernel does x @ Wi.
    # Weights / activations feed the MXU in bf16; accumulation stays f32.
    wi = jnp.asarray(w_i2h).astype(jnp.bfloat16).T       # (input_size, hidden_size)
    wh = jnp.asarray(w_h2h).astype(jnp.bfloat16).T       # (hidden_size, hidden_size)
    x_bf = jnp.asarray(x).astype(jnp.bfloat16)

    grid = (batch // b_tile, seq_len // t_chunk)

    grid_spec = pltpu.PrefetchScalarGridSpec(
        num_scalar_prefetch=0,
        grid=grid,
        in_specs=[
            pl.BlockSpec((t_chunk, b_tile, input_size), lambda b, c: (c, b, 0)),
            pl.BlockSpec((input_size, hidden_size), lambda b, c: (0, 0)),
            pl.BlockSpec((hidden_size, hidden_size), lambda b, c: (0, 0)),
        ],
        out_specs=pl.BlockSpec((t_chunk, b_tile, hidden_size),
                               lambda b, c: (c, b, 0)),
        scratch_shapes=[pltpu.VMEM((b_tile, hidden_size), jnp.float32)],
    )

    output = pl.pallas_call(
        rnn_kernel,
        out_shape=jax.ShapeDtypeStruct((seq_len, batch, hidden_size), jnp.float32),
        grid_spec=grid_spec,
        compiler_params=pltpu.CompilerParams(
            # batch tiles are independent (megacore on v7x); time is sequential
            dimension_semantics=("parallel", "arbitrary"),
        ),
    )(x_bf, wi, wh)

    return output, output[-1]


def rnn_reference(x, w_i2h, w_h2h):
    """Pure-JAX f32 reference matching the PyTorch forward exactly."""
    wi = w_i2h.T
    wh = w_h2h.T
    h0 = jnp.zeros((x.shape[1], w_i2h.shape[0]), jnp.float32)

    def step(h, x_t):
        h_new = jnp.tanh(x_t @ wi + h @ wh)
        return h_new, h_new

    h_final, out = jax.lax.scan(step, h0, x)
    return out, h_final


if __name__ == "__main__":
    seq_len, batch, input_size, hidden_size = 8, 16, 16, 32

    key = jax.random.PRNGKey(0)
    kx, ki, kh = jax.random.split(key, 3)

    x = jax.random.normal(kx, (seq_len, batch, input_size), jnp.float32)
    # Deterministic "PyTorch-like" uniform init: U(-1/sqrt(fan_in), 1/sqrt(fan_in))
    bound_i = 1.0 / jnp.sqrt(jnp.float32(input_size))
    bound_h = 1.0 / jnp.sqrt(jnp.float32(hidden_size))
    w_i2h = jax.random.uniform(ki, (hidden_size, input_size), jnp.float32,
                               -bound_i, bound_i)
    w_h2h = jax.random.uniform(kh, (hidden_size, hidden_size), jnp.float32,
                               -bound_h, bound_h)

    out, h_final = rnn_forward(x, w_i2h, w_h2h, t_chunk=4, b_tile=8)
    out = jax.block_until_ready(out)
    h_final = jax.block_until_ready(h_final)

    out_ref, h_ref = rnn_reference(x, w_i2h, w_h2h)
    assert out.shape == (seq_len, batch, hidden_size)
    assert h_final.shape == (batch, hidden_size)
    # bf16 MXU matmuls (f32 accumulation / state) -> loosened tolerance.
    assert jnp.allclose(out, out_ref, atol=2e-2, rtol=2e-2)
    assert jnp.allclose(h_final, h_ref, atol=2e-2, rtol=2e-2)

    print("KERNEL_OK")
</pallas_src>

<mosaic_0001>
module attributes {stable_mosaic.version = 11 : i64} {
  func.func @rnn_kernel(%arg0: i32, %arg1: i32, %arg2: memref<4x8x16xbf16, #tpu.memory_space<vmem>>, %arg3: memref<16x32xbf16, #tpu.memory_space<vmem>>, %arg4: memref<32x32xbf16, #tpu.memory_space<vmem>>, %arg5: memref<4x8x32xf32, #tpu.memory_space<vmem>>, %arg6: memref<8x32xf32, #tpu.memory_space<vmem>>) attributes {dimension_semantics = [#tpu.dimension_semantics<parallel>, #tpu.dimension_semantics<arbitrary>], iteration_bounds = array<i64: 2, 2>, scalar_prefetch = 0 : i64, scratch_operands = 1 : i64, tpu.core_type = #tpu.core_type<tc>, window_params = [{transform_indices = @transform_0, window_bounds = array<i64: 4, 8, 16>}, {pipeline_mode = #tpu.pipeline_mode<synchronous>, transform_indices = @transform_1, window_bounds = array<i64: 16, 32>}, {pipeline_mode = #tpu.pipeline_mode<synchronous>, transform_indices = @transform_2, window_bounds = array<i64: 32, 32>}, {transform_indices = @transform_3, window_bounds = array<i64: 4, 8, 32>}]} {
    %c0_i32 = arith.constant 0 : i32
    %0 = arith.cmpi eq, %arg1, %c0_i32 : i32
    %1 = arith.extui %0 : i1 to i32
    %c0_i32_0 = arith.constant 0 : i32
    %2 = arith.cmpi ne, %1, %c0_i32_0 : i32
    scf.if %2 {
      %cst_24 = arith.constant 0.000000e+00 : f32
      %47 = vector.broadcast %cst_24 : f32 to vector<8x32xf32>
      %c0_25 = arith.constant 0 : index
      %c0_26 = arith.constant 0 : index
      %48 = vector.load %arg6[%c0_25, %c0_26] : memref<8x32xf32, #tpu.memory_space<vmem>>, vector<8x32xf32>
      tpu.vector_store %arg6[%c0_25, %c0_26], %47 {strides = array<i32>} : memref<8x32xf32, #tpu.memory_space<vmem>>, vector<8x32xf32>,
    } else {
    }
    %c0 = arith.constant 0 : index
    %c0_1 = arith.constant 0 : index
    %c0_2 = arith.constant 0 : index
    %3 = vector.load %arg2[%c0, %c0_1, %c0_2] : memref<4x8x16xbf16, #tpu.memory_space<vmem>>, vector<4x8x16xbf16>
    %4 = vector.shape_cast %3 : vector<4x8x16xbf16> to vector<32x16xbf16>
    %c0_3 = arith.constant 0 : index
    %c0_4 = arith.constant 0 : index
    %5 = vector.load %arg3[%c0_3, %c0_4] : memref<16x32xbf16, #tpu.memory_space<vmem>>, vector<16x32xbf16>
    %cst = arith.constant dense<0.000000e+00> : vector<32x32xf32>
    %6 = tpu.matmul %4, %5, %cst {dimension_numbers = #tpu.dot_dimension_numbers<[1], [0], [0], [1], [0, 0, 1, 1], [], []>} : vector<32x16xbf16>, vector<16x32xbf16>, vector<32x32xf32> -> vector<32x32xf32>
    %7 = vector.shape_cast %6 : vector<32x32xf32> to vector<4x8x32xf32>
    %c0_5 = arith.constant 0 : index
    %c0_6 = arith.constant 0 : index
    %8 = vector.load %arg4[%c0_5, %c0_6] : memref<32x32xbf16, #tpu.memory_space<vmem>>, vector<32x32xbf16>
    %c0_7 = arith.constant 0 : index
    %c0_8 = arith.constant 0 : index
    %9 = vector.load %arg6[%c0_7, %c0_8] : memref<8x32xf32, #tpu.memory_space<vmem>>, vector<8x32xf32>
    %10 = vector.extract_strided_slice %7 {offsets = [0, 0, 0], sizes = [1, 8, 32], strides = [1, 1, 1]} : vector<4x8x32xf32> to vector<1x8x32xf32>
    %11 = vector.shape_cast %10 : vector<1x8x32xf32> to vector<8x32xf32>
    %12 = arith.truncf %9 : vector<8x32xf32> to vector<8x32xbf16>
    %cst_9 = arith.constant dense<0.000000e+00> : vector<8x32xf32>
    %13 = tpu.matmul %12, %8, %cst_9 {dimension_numbers = #tpu.dot_dimension_numbers<[1], [0], [0], [1], [0, 0, 1, 1], [], []>} : vector<8x32xbf16>, vector<32x32xbf16>, vector<8x32xf32> -> vector<8x32xf32>
    %14 = arith.addf %11, %13 : vector<8x32xf32>
    %15 = math.tanh %14 : vector<8x32xf32>
    %c0_10 = arith.constant 0 : index
    %c0_11 = arith.constant 0 : index
    %c0_12 = arith.constant 0 : index
    %16 = vector.load %arg5[%c0_10, %c0_11, %c0_12] : memref<4x8x32xf32, #tpu.memory_space<vmem>>, vector<1x8x32xf32>
    %17 = vector.shape_cast %16 : vector<1x8x32xf32> to vector<8x32xf32>
    %18 = vector.shape_cast %15 : vector<8x32xf32> to vector<1x8x32xf32>
    tpu.vector_store %arg5[%c0_10, %c0_11, %c0_12], %18 {strides = array<i32>} : memref<4x8x32xf32, #tpu.memory_space<vmem>>, vector<1x8x32xf32>,
    %19 = vector.extract_strided_slice %7 {offsets = [1, 0, 0], sizes = [1, 8, 32], strides = [1, 1, 1]} : vector<4x8x32xf32> to vector<1x8x32xf32>
    %20 = vector.shape_cast %19 : vector<1x8x32xf32> to vector<8x32xf32>
    %21 = arith.truncf %15 : vector<8x32xf32> to vector<8x32xbf16>
    %cst_13 = arith.constant dense<0.000000e+00> : vector<8x32xf32>
    %22 = tpu.matmul %21, %8, %cst_13 {dimension_numbers = #tpu.dot_dimension_numbers<[1], [0], [0], [1], [0, 0, 1, 1], [], []>} : vector<8x32xbf16>, vector<32x32xbf16>, vector<8x32xf32> -> vector<8x32xf32>
    %23 = arith.addf %20, %22 : vector<8x32xf32>
    %24 = math.tanh %23 : vector<8x32xf32>
    %c1 = arith.constant 1 : index
    %c0_14 = arith.constant 0 : index
    %c0_15 = arith.constant 0 : index
    %25 = vector.load %arg5[%c1, %c0_14, %c0_15] : memref<4x8x32xf32, #tpu.memory_space<vmem>>, vector<1x8x32xf32>
    %26 = vector.shape_cast %25 : vector<1x8x32xf32> to vector<8x32xf32>
    %27 = vector.shape_cast %24 : vector<8x32xf32> to vector<1x8x32xf32>
    tpu.vector_store %arg5[%c1, %c0_14, %c0_15], %27 {strides = array<i32>} : memref<4x8x32xf32, #tpu.memory_space<vmem>>, vector<1x8x32xf32>,
    %28 = vector.extract_strided_slice %7 {offsets = [2, 0, 0], sizes = [1, 8, 32], strides = [1, 1, 1]} : vector<4x8x32xf32> to vector<1x8x32xf32>
    %29 = vector.shape_cast %28 : vector<1x8x32xf32> to vector<8x32xf32>
    %30 = arith.truncf %24 : vector<8x32xf32> to vector<8x32xbf16>
    %cst_16 = arith.constant dense<0.000000e+00> : vector<8x32xf32>
    %31 = tpu.matmul %30, %8, %cst_16 {dimension_numbers = #tpu.dot_dimension_numbers<[1], [0], [0], [1], [0, 0, 1, 1], [], []>} : vector<8x32xbf16>, vector<32x32xbf16>, vector<8x32xf32> -> vector<8x32xf32>
    %32 = arith.addf %29, %31 : vector<8x32xf32>
    %33 = math.tanh %32 : vector<8x32xf32>
    %c2 = arith.constant 2 : index
    %c0_17 = arith.constant 0 : index
    %c0_18 = arith.constant 0 : index
    %34 = vector.load %arg5[%c2, %c0_17, %c0_18] : memref<4x8x32xf32, #tpu.memory_space<vmem>>, vector<1x8x32xf32>
    %35 = vector.shape_cast %34 : vector<1x8x32xf32> to vector<8x32xf32>
    %36 = vector.shape_cast %33 : vector<8x32xf32> to vector<1x8x32xf32>
    tpu.vector_store %arg5[%c2, %c0_17, %c0_18], %36 {strides = array<i32>} : memref<4x8x32xf32, #tpu.memory_space<vmem>>, vector<1x8x32xf32>,
    %37 = vector.extract_strided_slice %7 {offsets = [3, 0, 0], sizes = [1, 8, 32], strides = [1, 1, 1]} : vector<4x8x32xf32> to vector<1x8x32xf32>
    %38 = vector.shape_cast %37 : vector<1x8x32xf32> to vector<8x32xf32>
    %39 = arith.truncf %33 : vector<8x32xf32> to vector<8x32xbf16>
    %cst_19 = arith.constant dense<0.000000e+00> : vector<8x32xf32>
    %40 = tpu.matmul %39, %8, %cst_19 {dimension_numbers = #tpu.dot_dimension_numbers<[1], [0], [0], [1], [0, 0, 1, 1], [], []>} : vector<8x32xbf16>, vector<32x32xbf16>, vector<8x32xf32> -> vector<8x32xf32>
    %41 = arith.addf %38, %40 : vector<8x32xf32>
    %42 = math.tanh %41 : vector<8x32xf32>
    %c3 = arith.constant 3 : index
    %c0_20 = arith.constant 0 : index
    %c0_21 = arith.constant 0 : index
    %43 = vector.load %arg5[%c3, %c0_20, %c0_21] : memref<4x8x32xf32, #tpu.memory_space<vmem>>, vector<1x8x32xf32>
    %44 = vector.shape_cast %43 : vector<1x8x32xf32> to vector<8x32xf32>
    %45 = vector.shape_cast %42 : vector<8x32xf32> to vector<1x8x32xf32>
    tpu.vector_store %arg5[%c3, %c0_20, %c0_21], %45 {strides = array<i32>} : memref<4x8x32xf32, #tpu.memory_space<vmem>>, vector<1x8x32xf32>,
    %c0_22 = arith.constant 0 : index
    %c0_23 = arith.constant 0 : index
    %46 = vector.load %arg6[%c0_22, %c0_23] : memref<8x32xf32, #tpu.memory_space<vmem>>, vector<8x32xf32>
    tpu.vector_store %arg6[%c0_22, %c0_23], %42 {strides = array<i32>} : memref<8x32xf32, #tpu.memory_space<vmem>>, vector<8x32xf32>,
    return
  }
  func.func @transform_0(%arg0: i32, %arg1: i32) -> (i32, i32, i32) {
    %c0_i32 = arith.constant 0 : i32
    %c0_i32_0 = arith.constant 0 : i32
    return %arg1, %arg0, %c0_i32 : i32, i32, i32
  }
  func.func @transform_1(%arg0: i32, %arg1: i32) -> (i32, i32) {
    %c0_i32 = arith.constant 0 : i32
    %c0_i32_0 = arith.constant 0 : i32
    %c0_i32_1 = arith.constant 0 : i32
    return %c0_i32, %c0_i32_0 : i32, i32
  }
  func.func @transform_2(%arg0: i32, %arg1: i32) -> (i32, i32) {
    %c0_i32 = arith.constant 0 : i32
    %c0_i32_0 = arith.constant 0 : i32
    %c0_i32_1 = arith.constant 0 : i32
    return %c0_i32, %c0_i32_0 : i32, i32
  }
  func.func @transform_3(%arg0: i32, %arg1: i32) -> (i32, i32, i32) {
    %c0_i32 = arith.constant 0 : i32
    %c0_i32_0 = arith.constant 0 : i32
    return %arg1, %arg0, %c0_i32 : i32, i32, i32
  }
}

</mosaic_0001>

<llo_original>
// kernel: tpu_custom_call.1
$region0: #{tpu_custom_call.1}
  #allocation0 [shape = 'u32[]', space=smem, size = 0x4, offset = 0x4, fixed_abs, tag = 'smem constant byte address 0x4 - core index']
  #allocation1 [shape = 'u32[144,128]{1,0:T(1,128)}', space=vmem, size = 0x12000, scoped, tag = 'internal scratch']
  #allocation2 [shape = 'f32[8,32]{1,0:T(8,128)}', space=vmem, size = 0x1000, scoped, tag = 'scratch operand']
  %s0 = inlined_call_operand.hbm [shape: bf16[8,16,16], index: 0, kind: input, shape index: {}]
  %s1 = inlined_call_operand.hbm [shape: bf16[16,32], index: 1, kind: input, shape index: {}]
  %s2 = inlined_call_operand.hbm [shape: bf16[32,32], index: 2, kind: input, shape index: {}]
  %s3 = inlined_call_operand.hbm [shape: f32[8,16,32], index: 3, kind: output, shape index: {}]
  %s4 = sld [smem:[#allocation0]]
  $region61: #{tpu_custom_call.1} parent=0
    _
  %s6 = ssub.s32 1, %s4
  %s7 = scalar_select 0, %s6, %s4
  $region1: #{tpu_custom_call.1} parent=0
    #allocation3 [shape = 'u8[16384]{0}', space=vmem, size = 0x4000, scoped, tag = 'input window, operand 0']
    #allocation4 [shape = 's32[2]{0}', space=sflag, size = 0x8, scoped, tag = 'scoped memory for tpu_custom_call.1']
    #allocation5 [shape = 's32[2]{0}', space=sflag, size = 0x8, scoped, tag = 'scoped memory for tpu_custom_call.1']
    #allocation6 [shape = 'u8[4096]{0}', space=vmem, size = 0x1000, scoped, tag = 'input window, operand 1, single buffered']
    #allocation7 [shape = 's32[1]{0}', space=sflag, size = 0x4, scoped, tag = 'scoped memory for tpu_custom_call.1']
    #allocation8 [shape = 'u8[8192]{0}', space=vmem, size = 0x2000, scoped, tag = 'input window, operand 2, single buffered']
    #allocation9 [shape = 'u8[32768]{0}', space=vmem, size = 0x8000, scoped, tag = 'output window, operand 0']
    %8 = vsyncpa [#allocation4], 0
    %s9 = scalar_lea.sflag [#allocation4], 1
    %10 = vsyncpa %s9, 0
    %11 = vsyncpa [#allocation7], 0
    %12 = vsyncpa [#allocation5], 0
    %s13 = scalar_lea.sflag [#allocation5], 1
    %14 = vsyncpa %s13, 0
    loop: start=0, step=1, limit=6
    $region2: #{tpu_custom_call.1} parent=1 // loop_pre_header
      _
    $region3: #{tpu_custom_call.1} parent=1 // loop_header
      %s16 = sphi 0, %s20
      %p17 = scmp.ge.s32.totalorder %s16, 6
      %s23 = sphi 0, %s35
      %s24 = sphi 0, %s31
      %s25 = sphi 0, %s23
      %s26 = sphi 0, %s24
      %s27 = sphi 0, %s25
      %s28 = sphi 0, %s26
      %s40 = sphi 0, %s42
      %s43 = sphi 0, %s40
      %s44 = sphi 0, %s43
      %s60 = sphi 0, %s44
      %s64 = sphi 0, %s64
      %s66 = sphi 0, %s64
      %s67 = sphi 0, %s66
      %s81 = sphi 0, %s67
      %s85 = sphi 0, %s85
      %s87 = sphi 0, %s85
      %s88 = sphi 0, %s87
      %s102 = sphi 0, %s88
      %s110 = sphi 0, %s112
      %s113 = sphi 0, %s110
      %s114 = sphi 0, %s113
      %s130 = sphi 0, %s114
    $region4: #{tpu_custom_call.1} parent=1 // loop_header_branch
      %19 = sbr.rel (%p17) target = $region8
    $region5: #{tpu_custom_call.1} parent=1 // loop_body
      %s21 = ssub.s32 %s16, 1
      %s22 = ssub.s32 %s16, 2
      %s29 = sadd.s32 1, %s24
      %p30 = scmp.ge.s32.totalorder %s29, 2
      %s31 = scalar_select %p30, 0, %s29
      %s32 = sadd.s32 1, %s23
      %s33 = scalar_select %p30, %s32, %s23
      %p34 = scmp.ge.s32.totalorder %s33, 2
      %s35 = scalar_select %p34, 0, %s33
      %s36 = ssub.s32 %s24, %s31
      %s37 = ssub.s32 %s23, %s35
      %s38 = sor.u32 %s36, %s37
      %p39 = scmp.eq.s32.totalorder %s38, 0
      %s41 = sadd.s32 %s40, 1
      %s42 = scalar_select %p39, %s40, %s41
      %p45 = pneg %p39
      %p46 = scmp.eq.s32.totalorder %s16, 3
      %p47 = por %p45, %p46
      %p48 = scmp.ne.s32.totalorder %s40, %s43
      %p49 = scmp.eq.s32.totalorder %s16, 0
      %p50 = por %p48, %p49
      %p51 = scmp.ne.s32.totalorder %s40, %s43
      %p52 = scmp.eq.s32.totalorder %s21, 3
      %p53 = por %p51, %p52
      %p54 = scmp.ne.s32.totalorder %s43, %s44
      %p55 = scmp.eq.s32.totalorder %s21, 0
      %p56 = por %p54, %p55
      %p57 = scmp.ne.s32.totalorder %s43, %s44
      %p58 = scmp.eq.s32.totalorder %s22, 3
      %p59 = por %p57, %p58
      %p61 = scmp.ne.s32.totalorder %s44, %s60
      %p62 = scmp.eq.s32.totalorder %s22, 0
      %p63 = por %p61, %p62
      %s65 = sadd.s32 %s64, 1
      %p68 = scmp.eq.s32.totalorder %s16, 3
      %p69 = scmp.ne.s32.totalorder %s64, %s66
      %p70 = scmp.eq.s32.totalorder %s16, 0
      %p71 = por %p69, %p70
      %p72 = scmp.ne.s32.totalorder %s64, %s66
      %p73 = scmp.eq.s32.totalorder %s21, 3
      %p74 = por %p72, %p73
      %p75 = scmp.ne.s32.totalorder %s66, %s67
      %p76 = scmp.eq.s32.totalorder %s21, 0
      %p77 = por %p75, %p76
      %p78 = scmp.ne.s32.totalorder %s66, %s67
      %p79 = scmp.eq.s32.totalorder %s22, 3
      %p80 = por %p78, %p79
      %p82 = scmp.ne.s32.totalorder %s67, %s81
      %p83 = scmp.eq.s32.totalorder %s22, 0
      %p84 = por %p82, %p83
      %s86 = sadd.s32 %s85, 1
      %p89 = scmp.eq.s32.totalorder %s16, 3
      %p90 = scmp.ne.s32.totalorder %s85, %s87
      %p91 = scmp.eq.s32.totalorder %s16, 0
      %p92 = por %p90, %p91
      %p93 = scmp.ne.s32.totalorder %s85, %s87
      %p94 = scmp.eq.s32.totalorder %s21, 3
      %p95 = por %p93, %p94
      %p96 = scmp.ne.s32.totalorder %s87, %s88
      %p97 = scmp.eq.s32.totalorder %s21, 0
      %p98 = por %p96, %p97
      %p99 = scmp.ne.s32.totalorder %s87, %s88
      %p100 = scmp.eq.s32.totalorder %s22, 3
      %p101 = por %p99, %p100
      %p103 = scmp.ne.s32.totalorder %s88, %s102
      %p104 = scmp.eq.s32.totalorder %s22, 0
      %p105 = por %p103, %p104
      %s106 = ssub.s32 %s24, %s31
      %s107 = ssub.s32 %s23, %s35
      %s108 = sor.u32 %s106, %s107
      %p109 = scmp.eq.s32.totalorder %s108, 0
      %s111 = sadd.s32 %s110, 1
      %s112 = scalar_select %p109, %s110, %s111
      %p115 = pneg %p109
      %p116 = scmp.eq.s32.totalorder %s16, 3
      %p117 = por %p115, %p116
      %p118 = scmp.ne.s32.totalorder %s110, %s113
      %p119 = scmp.eq.s32.totalorder %s16, 0
      %p120 = por %p118, %p119
      %p121 = scmp.ne.s32.totalorder %s110, %s113
      %p122 = scmp.eq.s32.totalorder %s21, 3
      %p123 = por %p121, %p122
      %p124 = scmp.ne.s32.totalorder %s113, %s114
      %p125 = scmp.eq.s32.totalorder %s21, 0
      %p126 = por %p124, %p125
      %p127 = scmp.ne.s32.totalorder %s113, %s114
      %p128 = scmp.eq.s32.totalorder %s22, 3
      %p129 = por %p127, %p128
      %p131 = scmp.ne.s32.totalorder %s114, %s130
      %p132 = scmp.eq.s32.totalorder %s22, 0
      %p133 = por %p131, %p132
      %p134 = scmp.le.s32.totalorder 1, %s16
      %p135 = scmp.lt.s32.totalorder %s16, 5
      %p136 = pnand %p134, %p135
      %p137 = pneg %p136
      // Predicated region
      $region9: #{tpu_custom_call.1} parent=5 // pred_check
        _
      $region10: #{tpu_custom_call.1} parent=5 // pred_check_branch
        %139 = sbr.rel (%p136) target = $region12
      $region11: #{tpu_custom_call.1} parent=5 // pred_region
        %s140 = ssub.s32 %s16, 1
        // Predicated region
        $region13: #{tpu_custom_call.1} parent=11 // pred_check
          %p141 = pneg %p77
        $region14: #{tpu_custom_call.1} parent=11 // pred_check_branch
          %143 = sbr.rel (%p141) target = $region16
        $region15: #{tpu_custom_call.1} parent=11 // pred_region
          %s145 = ssub.s32 128, 128
          %146 = vsyncadd [#allocation7], %s145
          %s147 = sshll.u32 [#allocation6], 4
          %s148 = int_to_ptr.vmem [resolvable:$true] %s147
          %153 = dma.hbm_to_vmem [thread:$0]  %s1, 128, %s148, [#allocation7], 64, 64, 4
        $region16: #{tpu_custom_call.1} parent=11 // pred_fallthru
          _
        // Predicated region
        $region17: #{tpu_custom_call.1} parent=11 // pred_check
          %p154 = pneg %p98
        $region18: #{tpu_custom_call.1} parent=11 // pred_check_branch
          %156 = sbr.rel (%p154) target = $region20
        $region19: #{tpu_custom_call.1} parent=11 // pred_region
          %s158 = ssub.s32 256, 256
          %159 = vsyncadd [#allocation7], %s158
          %s160 = sshll.u32 [#allocation8], 4
          %s161 = int_to_ptr.vmem [resolvable:$true] %s160
          %166 = dma.hbm_to_vmem [thread:$0]  %s2, 256, %s161, [#allocation7], 64, 64, 4
        $region20: #{tpu_custom_call.1} parent=11 // pred_fallthru
          _
      $region12: #{tpu_custom_call.1} parent=5 // pred_fallthru
        _
      %p167 = scmp.lt.s32.totalorder %s16, 4
      // Predicated region
      $region21: #{tpu_custom_call.1} parent=5 // pred_check
        %p168 = pneg %p167
      $region22: #{tpu_custom_call.1} parent=5 // pred_check_branch
        %170 = sbr.rel (%p168) target = $region24
      $region23: #{tpu_custom_call.1} parent=5 // pred_region
        // Predicated region
        $region25: #{tpu_custom_call.1} parent=23 // pred_check
          %p171 = pneg %p50
        $region26: #{tpu_custom_call.1} parent=23 // pred_check_branch
          %173 = sbr.rel (%p171) target = $region28
        $region27: #{tpu_custom_call.1} parent=23 // pred_region
          %s174 = sand.u32 %s40, 1
          %s175 = scalar_lea.sflag [#allocation4], %s174
          %s176 = sand.u32 %s40, 1
          %s177 = smul.addr %s176, 16
          %s178 = scalar_lea.vmem [#allocation3], %s177
          %s179 = smul.u32 4, %s24
          %s181 = ssub.s32 256, 256
          %182 = vsyncadd %s175, %s181
          %s183 = smul.addr %s179, 2
          %s184 = sadd.s32 %s23, %s183
          %s185 = smul.addr %s184, 64
          %s186 = scalar_lea.hbm %s0, %s185
          %s187 = sshll.u32 %s178, 4
          %s188 = int_to_ptr.vmem [resolvable:$true] %s187
          %193 = dma.hbm_to_vmem [thread:$0]  %s186, 256, %s188, %s175, 128, 64, 4
        $region28: #{tpu_custom_call.1} parent=23 // pred_fallthru
          _
      $region24: #{tpu_custom_call.1} parent=5 // pred_fallthru
        _
      %p194 = scmp.le.s32.totalorder 1, %s16
      %p195 = scmp.lt.s32.totalorder %s16, 5
      %p196 = pnand %p194, %p195
      %p197 = pneg %p196
      // Predicated region
      $region29: #{tpu_custom_call.1} parent=5 // pred_check
        _
      $region30: #{tpu_custom_call.1} parent=5 // pred_check_branch
        %199 = sbr.rel (%p196) target = $region32
      $region31: #{tpu_custom_call.1} parent=5 // pred_region
        %s200 = ssub.s32 %s16, 1
        %s201 = sand.u32 %s43, 1
        %s202 = scalar_lea.sflag [#allocation4], %s201
        %s203 = sand.u32 %s43, 1
        %s204 = smul.addr %s203, 16
        %s205 = scalar_lea.vmem [#allocation3], %s204
        // Predicated region
        $region33: #{tpu_custom_call.1} parent=31 // pred_check
          %p206 = pneg %p56
        $region34: #{tpu_custom_call.1} parent=31 // pred_check_branch
          %208 = sbr.rel (%p206) target = $region36
        $region35: #{tpu_custom_call.1} parent=31 // pred_region
          %209 = dma.done %s202, 256
        $region36: #{tpu_custom_call.1} parent=31 // pred_fallthru
          _
        // Predicated region
        $region37: #{tpu_custom_call.1} parent=31 // pred_check
          %p210 = pneg %p77
        $region38: #{tpu_custom_call.1} parent=31 // pred_check_branch
          %212 = sbr.rel (%p210) target = $region40
        $region39: #{tpu_custom_call.1} parent=31 // pred_region
          %213 = dma.done [#allocation7], 128
        $region40: #{tpu_custom_call.1} parent=31 // pred_fallthru
          _
        // Predicated region
        $region41: #{tpu_custom_call.1} parent=31 // pred_check
          %p214 = pneg %p98
        $region42: #{tpu_custom_call.1} parent=31 // pred_check_branch
          %216 = sbr.rel (%p214) target = $region44
        $region43: #{tpu_custom_call.1} parent=31 // pred_region
          %217 = dma.done [#allocation7], 256
        $region44: #{tpu_custom_call.1} parent=31 // pred_fallthru
          _
        %s218 = sand.u32 %s43, 1
        %s219 = scalar_lea.sflag [#allocation4], %s218
        %s220 = sand.u32 %s43, 1
        %s221 = smul.addr %s220, 16
        %s222 = scalar_lea.vmem [#allocation3], %s221
        %p223 = pneg %p56
        %p224 = pneg %p53
        %p225 = pneg %p77
        %p226 = pneg %p74
        %p227 = pneg %p98
        %p228 = pneg %p95
        %p229 = pneg %p126
        %p230 = pneg %p123
        %s231 = sand.u32 %s113, 1
        %s232 = scalar_lea.sflag [#allocation5], %s231
        %s233 = sand.u32 %s113, 1
        %s234 = smul.addr %s233, 32
        %s235 = scalar_lea.vmem [#allocation9], %s234
        %s236 = smul.u32 4, %s26
        %s237 = smul.u32 4, %s26
        %p239 = scmp.eq.s32.totalorder %s26, 0
        // Predicated region
        $region45: #{tpu_custom_call.1} parent=31 // pred_check
          %p240 = pneg %p239
        $region46: #{tpu_custom_call.1} parent=31 // pred_check_branch
          %242 = sbr.rel (%p240) target = $region48
        $region47: #{tpu_custom_call.1} parent=31 // pred_region
          %vm243 = vcmask 261120
          %244 = vst.msk [vmem:[#allocation2] sm:$0xff] %vm243, 0.0
        $region48: #{tpu_custom_call.1} parent=31 // pred_fallthru
          _
        %v245 = vld [vmem:[%s205] sm:$0xf]
        %v246 = vld [vmem:[%s205 + $0x4] sm:$0xf]
        %v247 = vld [vmem:[%s205 + $0x8] sm:$0xf]
        %v248 = vld [vmem:[%s205 + $0xc] sm:$0xf]
        %v249 = vld [vmem:[#allocation6] sm:$0xf]
        %v250 = vld [vmem:[#allocation6 + $0x4] sm:$0xf]
        %v255 = vunpack.c.l.b16 %v245
        %v256 = vunpack.c.l.b16 %v246
        %v257 = vunpack.c.l.b16 %v247
        %v258 = vunpack.c.l.b16 %v248
        %v259 = vpack.c.b16 %v256, %v255
        %v260 = vpack.c.b16 %v258, %v257
        %v263 = vunpack.c.l.b16 %v249
        %v264 = vunpack.c.l.b16 %v250
        %v265 = vpack.c.b16 %v264, %v263
        %vm267 = vcmask 130048
        %v269 = vsel %vm267, %v259, 0
        %v272 = vsel %vm267, %v260, 0
        %274 = vmatprep.subr.bf16.mxu0 0
        %275 = vmatpush1.bf16.msra.mxu0 %v265
        %276 = vmatprep.subr.bf16.mxu0 0
        %277 = vmatpush1.bf16.msra.mxu0 0
        %278 = vmatprep.subr.bf16.mxu0 0
        %279 = vmatpush1.bf16.msra.mxu0 0
        %280 = vmatprep.subr.bf16.mxu0 0
        %281 = vmatpush1.bf16.msra.mxu0 0
        %282 = vmatprep.subr.bf16.mxu0 0
        %283 = vmatpush1.bf16.msra.mxu0 0
        %284 = vmatprep.subr.bf16.mxu0 0
        %285 = vmatpush1.bf16.msra.mxu0 0
        %286 = vmatprep.subr.bf16.mxu0 0
        %287 = vmatpush1.bf16.msra.mxu0 0
        %288 = vmatprep.subr.bf16.mxu0 0
        %289 = vmatpush1.bf16.msra.mxu0 0
        %290 = vmatprep.subr.bf16.mxu0 0
        %291 = vmatpush1.bf16.msra.mxu0 0
        %292 = vmatprep.subr.bf16.mxu0 0
        %293 = vmatpush1.bf16.msra.mxu0 0
        %294 = vmatprep.subr.bf16.mxu0 0
        %295 = vmatpush1.bf16.msra.mxu0 0
        %296 = vmatprep.subr.bf16.mxu0 0
        %297 = vmatpush1.bf16.msra.mxu0 0
        %298 = vmatprep.subr.bf16.mxu0 0
        %299 = vmatpush1.bf16.msra.mxu0 0
        %300 = vmatprep.subr.bf16.mxu0 0
        %301 = vmatpush1.bf16.msra.mxu0 0
        %302 = vmatprep.subr.bf16.mxu0 0
        %303 = vmatpush1.bf16.msra.mxu0 0
        %304 = vmatprep.subr.bf16.mxu0 0
        %305 = vmatpush1.bf16.msra.mxu0 0
        %306 = vmatprep.mubr.bf16.mxu0 0
        %307 = vmatmul.mubr.bf16.gmra.mrb[0].mxu0 %v269
        %v308 = vpop.f32.mrb[0].mxu0
        %v309 = vadd.f32 0.0, %v308
        %v310 = vpop.f32.mrb[0].mxu0
        %v311 = vpop.f32.mrb[0].mxu0
        %v312 = vadd.f32 0.0, %v311
        %v313 = vpop.f32.mrb[0].mxu0
        %314 = vmatprep.mubr.bf16.mxu0 0
        %315 = vmatmul.mubr.bf16.gmra.mrb[0].mxu0 %v272
        %v316 = vpop.f32.mrb[0].mxu0
        %v317 = vadd.f32 0.0, %v316
        %v318 = vpop.f32.mrb[0].mxu0
        %v319 = vpop.f32.mrb[0].mxu0
        %v320 = vadd.f32 0.0, %v319
        %v321 = vpop.f32.mrb[0].mxu0
        %322 = vdwg.mxu0
        %v323 = vld [vmem:[#allocation8] sm:$0xf]
        %v324 = vld [vmem:[#allocation8 + $0x4] sm:$0xf]
        %v325 = vld [vmem:[#allocation8 + $0x8] sm:$0xf]
        %v326 = vld [vmem:[#allocation8 + $0xc] sm:$0xf]
        %v327 = vld [vmem:[#allocation2] sm:$0xff]
        %v328 = vpack.c.bf16 %v327, %v327
        %v333 = vunpack.c.l.b16 %v323
        %v334 = vunpack.c.l.b16 %v324
        %v335 = vunpack.c.l.b16 %v325
        %v336 = vunpack.c.l.b16 %v326
        %v337 = vpack.c.b16 %v334, %v333
        %v338 = vpack.c.b16 %v336, %v335
        %vm341 = vcmask 261120
        %v343 = vsel %vm341, %v328, 0
        %345 = vmatprep.subr.bf16.mxu0 0
        %346 = vmatpush1.bf16.msra.mxu0 %v337
        %347 = vmatprep.subr.bf16.mxu0 0
        %348 = vmatpush1.bf16.msra.mxu0 %v338
        %349 = vmatprep.subr.bf16.mxu0 0
        %350 = vmatpush1.bf16.msra.mxu0 0
        %351 = vmatprep.subr.bf16.mxu0 0
        %352 = vmatpush1.bf16.msra.mxu0 0
        %353 = vmatprep.subr.bf16.mxu0 0
        %354 = vmatpush1.bf16.msra.mxu0 0
        %355 = vmatprep.subr.bf16.mxu0 0
        %356 = vmatpush1.bf16.msra.mxu0 0
        %357 = vmatprep.subr.bf16.mxu0 0
        %358 = vmatpush1.bf16.msra.mxu0 0
        %359 = vmatprep.subr.bf16.mxu0 0
        %360 = vmatpush1.bf16.msra.mxu0 0
        %361 = vmatprep.subr.bf16.mxu0 0
        %362 = vmatpush1.bf16.msra.mxu0 0
        %363 = vmatprep.subr.bf16.mxu0 0
        %364 = vmatpush1.bf16.msra.mxu0 0
        %365 = vmatprep.subr.bf16.mxu0 0
        %366 = vmatpush1.bf16.msra.mxu0 0
        %367 = vmatprep.subr.bf16.mxu0 0
        %368 = vmatpush1.bf16.msra.mxu0 0
        %369 = vmatprep.subr.bf16.mxu0 0
        %370 = vmatpush1.bf16.msra.mxu0 0
        %371 = vmatprep.subr.bf16.mxu0 0
        %372 = vmatpush1.bf16.msra.mxu0 0
        %373 = vmatprep.subr.bf16.mxu0 0
        %374 = vmatpush1.bf16.msra.mxu0 0
        %375 = vmatprep.subr.bf16.mxu0 0
        %376 = vmatpush1.bf16.msra.mxu0 0
        %377 = vmatprep.mubr.bf16.mxu0 0
        %378 = vmatmul.mubr.bf16.gmra.mrb[0].mxu0 %v343
        %v379 = vpop.f32.mrb[0].mxu0
        %v380 = vadd.f32 0.0, %v379
        %v381 = vpop.f32.mrb[0].mxu0
        %v382 = vpop.f32.mrb[0].mxu0
        %v383 = vpop.f32.mrb[0].mxu0
        %384 = vdwg.mxu0
        %v385 = vadd.f32 %v309, %v380
        %v386 = vtanh.pop %v385
        %387 = vst.msk [vmem:[%s235] sm:$0xff] %vm341, %v386
        %v388 = vpack.c.bf16 %v386, %v386
        %v390 = vsel %vm341, %v388, 0
        %392 = vmatprep.subr.bf16.mxu0 0
        %393 = vmatpush1.bf16.msra.mxu0 %v337
        %394 = vmatprep.subr.bf16.mxu0 0
        %395 = vmatpush1.bf16.msra.mxu0 %v338
        %396 = vmatprep.subr.bf16.mxu0 0
        %397 = vmatpush1.bf16.msra.mxu0 0
        %398 = vmatprep.subr.bf16.mxu0 0
        %399 = vmatpush1.bf16.msra.mxu0 0
        %400 = vmatprep.subr.bf16.mxu0 0
        %401 = vmatpush1.bf16.msra.mxu0 0
        %402 = vmatprep.subr.bf16.mxu0 0
        %403 = vmatpush1.bf16.msra.mxu0 0
        %404 = vmatprep.subr.bf16.mxu0 0
        %405 = vmatpush1.bf16.msra.mxu0 0
        %406 = vmatprep.subr.bf16.mxu0 0
        %407 = vmatpush1.bf16.msra.mxu0 0
        %408 = vmatprep.subr.bf16.mxu0 0
        %409 = vmatpush1.bf16.msra.mxu0 0
        %410 = vmatprep.subr.bf16.mxu0 0
        %411 = vmatpush1.bf16.msra.mxu0 0
        %412 = vmatprep.subr.bf16.mxu0 0
        %413 = vmatpush1.bf16.msra.mxu0 0
        %414 = vmatprep.subr.bf16.mxu0 0
        %415 = vmatpush1.bf16.msra.mxu0 0
        %416 = vmatprep.subr.bf16.mxu0 0
        %417 = vmatpush1.bf16.msra.mxu0 0
        %418 = vmatprep.subr.bf16.mxu0 0
        %419 = vmatpush1.bf16.msra.mxu0 0
        %420 = vmatprep.subr.bf16.mxu0 0
        %421 = vmatpush1.bf16.msra.mxu0 0
        %422 = vmatprep.subr.bf16.mxu0 0
        %423 = vmatpush1.bf16.msra.mxu0 0
        %424 = vmatprep.mubr.bf16.mxu0 0
        %425 = vmatmul.mubr.bf16.gmra.mrb[0].mxu0 %v390
        %v426 = vpop.f32.mrb[0].mxu0
        %v427 = vadd.f32 0.0, %v426
        %v428 = vpop.f32.mrb[0].mxu0
        %v429 = vpop.f32.mrb[0].mxu0
        %v430 = vpop.f32.mrb[0].mxu0
        %431 = vdwg.mxu0
        %v432 = vadd.f32 %v312, %v427
        %v433 = vtanh.pop %v432
        %s434 = scalar_lea.vmem %s235, 8 [#allocation9]
        %435 = vst.msk [vmem:[%s434] sm:$0xff] %vm341, %v433
        %v436 = vpack.c.bf16 %v433, %v433
        %v438 = vsel %vm341, %v436, 0
        %440 = vmatprep.subr.bf16.mxu0 0
        %441 = vmatpush1.bf16.msra.mxu0 %v337
        %442 = vmatprep.subr.bf16.mxu0 0
        %443 = vmatpush1.bf16.msra.mxu0 %v338
        %444 = vmatprep.subr.bf16.mxu0 0
        %445 = vmatpush1.bf16.msra.mxu0 0
        %446 = vmatprep.subr.bf16.mxu0 0
        %447 = vmatpush1.bf16.msra.mxu0 0
        %448 = vmatprep.subr.bf16.mxu0 0
        %449 = vmatpush1.bf16.msra.mxu0 0
        %450 = vmatprep.subr.bf16.mxu0 0
        %451 = vmatpush1.bf16.msra.mxu0 0
        %452 = vmatprep.subr.bf16.mxu0 0
        %453 = vmatpush1.bf16.msra.mxu0 0
        %454 = vmatprep.subr.bf16.mxu0 0
        %455 = vmatpush1.bf16.msra.mxu0 0
        %456 = vmatprep.subr.bf16.mxu0 0
        %457 = vmatpush1.bf16.msra.mxu0 0
        %458 = vmatprep.subr.bf16.mxu0 0
        %459 = vmatpush1.bf16.msra.mxu0 0
        %460 = vmatprep.subr.bf16.mxu0 0
        %461 = vmatpush1.bf16.msra.mxu0 0
        %462 = vmatprep.subr.bf16.mxu0 0
        %463 = vmatpush1.bf16.msra.mxu0 0
        %464 = vmatprep.subr.bf16.mxu0 0
        %465 = vmatpush1.bf16.msra.mxu0 0
        %466 = vmatprep.subr.bf16.mxu0 0
        %467 = vmatpush1.bf16.msra.mxu0 0
        %468 = vmatprep.subr.bf16.mxu0 0
        %469 = vmatpush1.bf16.msra.mxu0 0
        %470 = vmatprep.subr.bf16.mxu0 0
        %471 = vmatpush1.bf16.msra.mxu0 0
        %472 = vmatprep.mubr.bf16.mxu0 0
        %473 = vmatmul.mubr.bf16.gmra.mrb[0].mxu0 %v438
        %v474 = vpop.f32.mrb[0].mxu0
        %v475 = vadd.f32 0.0, %v474
        %v476 = vpop.f32.mrb[0].mxu0
        %v477 = vpop.f32.mrb[0].mxu0
        %v478 = vpop.f32.mrb[0].mxu0
        %479 = vdwg.mxu0
        %v480 = vadd.f32 %v317, %v475
        %v481 = vtanh.pop %v480
        %s482 = scalar_lea.vmem %s235, 16 [#allocation9]
        %483 = vst.msk [vmem:[%s482] sm:$0xff] %vm341, %v481
        %v484 = vpack.c.bf16 %v481, %v481
        %v486 = vsel %vm341, %v484, 0
        %488 = vmatprep.subr.bf16.mxu0 0
        %489 = vmatpush1.bf16.msra.mxu0 %v337
        %490 = vmatprep.subr.bf16.mxu0 0
        %491 = vmatpush1.bf16.msra.mxu0 %v338
        %492 = vmatprep.subr.bf16.mxu0 0
        %493 = vmatpush1.bf16.msra.mxu0 0
        %494 = vmatprep.subr.bf16.mxu0 0
        %495 = vmatpush1.bf16.msra.mxu0 0
        %496 = vmatprep.subr.bf16.mxu0 0
        %497 = vmatpush1.bf16.msra.mxu0 0
        %498 = vmatprep.subr.bf16.mxu0 0
        %499 = vmatpush1.bf16.msra.mxu0 0
        %500 = vmatprep.subr.bf16.mxu0 0
        %501 = vmatpush1.bf16.msra.mxu0 0
        %502 = vmatprep.subr.bf16.mxu0 0
        %503 = vmatpush1.bf16.msra.mxu0 0
        %504 = vmatprep.subr.bf16.mxu0 0
        %505 = vmatpush1.bf16.msra.mxu0 0
        %506 = vmatprep.subr.bf16.mxu0 0
        %507 = vmatpush1.bf16.msra.mxu0 0
        %508 = vmatprep.subr.bf16.mxu0 0
        %509 = vmatpush1.bf16.msra.mxu0 0
        %510 = vmatprep.subr.bf16.mxu0 0
        %511 = vmatpush1.bf16.msra.mxu0 0
        %512 = vmatprep.subr.bf16.mxu0 0
        %513 = vmatpush1.bf16.msra.mxu0 0
        %514 = vmatprep.subr.bf16.mxu0 0
        %515 = vmatpush1.bf16.msra.mxu0 0
        %516 = vmatprep.subr.bf16.mxu0 0
        %517 = vmatpush1.bf16.msra.mxu0 0
        %518 = vmatprep.subr.bf16.mxu0 0
        %519 = vmatpush1.bf16.msra.mxu0 0
        %520 = vmatprep.mubr.bf16.mxu0 0
        %521 = vmatmul.mubr.bf16.gmra.mrb[0].mxu0 %v486
        %v522 = vpop.f32.mrb[0].mxu0
        %v523 = vadd.f32 0.0, %v522
        %v524 = vpop.f32.mrb[0].mxu0
        %v525 = vpop.f32.mrb[0].mxu0
        %v526 = vpop.f32.mrb[0].mxu0
        %527 = vdwg.mxu0
        %v528 = vadd.f32 %v320, %v523
        %v529 = vtanh.pop %v528
        %s530 = scalar_lea.vmem %s235, 24 [#allocation9]
        %531 = vst.msk [vmem:[%s530] sm:$0xff] %vm341, %v529
        %532 = vst.msk [vmem:[#allocation2] sm:$0xff] %vm341, %v529
        %s533 = sand.u32 %s113, 1
        %s534 = scalar_lea.sflag [#allocation5], %s533
        %s535 = sand.u32 %s113, 1
        %s536 = smul.addr %s535, 32
        %s537 = scalar_lea.vmem [#allocation9], %s536
        // Predicated region
        $region49: #{tpu_custom_call.1} parent=31 // pred_check
          %p538 = pneg %p123
        $region50: #{tpu_custom_call.1} parent=31 // pred_check_branch
          %540 = sbr.rel (%p538) target = $region52
        $region51: #{tpu_custom_call.1} parent=31 // pred_region
          %s541 = smul.u32 4, %s26
          %s543 = ssub.s32 512, 512
          %544 = vsyncadd %s534, %s543
          %s545 = smul.addr %s541, 2
          %s546 = sadd.s32 %s25, %s545
          %s547 = smul.addr %s546, 128
          %s548 = scalar_lea.hbm %s3, %s547
          %s549 = sshll.u32 %s537, 4
          %s550 = int_to_ptr.vmem [resolvable:$true] %s549
          %555 = dma.vmem_to_hbm [thread:$0]  %s550, 512, %s548, %s534, 128, 256, 8
        $region52: #{tpu_custom_call.1} parent=31 // pred_fallthru
          _
      $region32: #{tpu_custom_call.1} parent=5 // pred_fallthru
        _
      %p556 = scmp.le.s32.totalorder 2, %s16
      // Predicated region
      $region53: #{tpu_custom_call.1} parent=5 // pred_check
        %p557 = pneg %p556
      $region54: #{tpu_custom_call.1} parent=5 // pred_check_branch
        %559 = sbr.rel (%p557) target = $region56
      $region55: #{tpu_custom_call.1} parent=5 // pred_region
        %s560 = ssub.s32 %s16, 2
        // Predicated region
        $region57: #{tpu_custom_call.1} parent=55 // pred_check
          %p561 = pneg %p129
        $region58: #{tpu_custom_call.1} parent=55 // pred_check_branch
          %563 = sbr.rel (%p561) target = $region60
        $region59: #{tpu_custom_call.1} parent=55 // pred_region
          %s564 = sand.u32 %s114, 1
          %s565 = scalar_lea.sflag [#allocation5], %s564
          %s566 = sand.u32 %s114, 1
          %s567 = smul.addr %s566, 32
          %s568 = scalar_lea.vmem [#allocation9], %s567
          %569 = dma.done %s565, 512
        $region60: #{tpu_custom_call.1} parent=55 // pred_fallthru
          _
      $region56: #{tpu_custom_call.1} parent=5 // pred_fallthru
        _
    $region6: #{tpu_custom_call.1} parent=1 // loop_footer
      %s20 = sadd.s32 1, %s16
    $region7: #{tpu_custom_call.1} parent=1 // loop_footer_branch
      %15 = sbr.rel target = $region3
    $region8: #{tpu_custom_call.1} parent=1 // loop_exit
      _
    %570 = vsyncpa [#allocation4], 1
    %s571 = scalar_lea.sflag [#allocation4], 1
    %572 = vsyncpa %s571, 1
    %573 = vsyncpa [#allocation7], 1
    %574 = vsyncpa [#allocation5], 1
    %s575 = scalar_lea.sflag [#allocation5], 1
    %576 = vsyncpa %s575, 1

</llo_original>
